<compile_context>
chip_gen: v7x
topology: tpu7x:2x2x1
jax: 0.10.0
libtpu: 0.0.40
codegen_flags: <defaults>
</compile_context>

<pallas_src>
from collections import namedtuple

import jax
import jax.numpy as jnp
from jax.experimental import pallas as pl
from jax.experimental.pallas import tpu as pltpu


# ----------------------------------------------------------------------------
# Fused Pallas kernel: conv-GEMM + bias + ReLU + global-avg-pool + linear
# ----------------------------------------------------------------------------

def _fused_scene_kernel(patches_ref, wc_ref, bc_ref, pool_ref, fcw_ref,
                        fcb_ref, out_ref):
    """
    patches_ref: (B*H*W, KP)    f32 VMEM  im2col patches, K zero-padded to 128
    wc_ref     : (KP, C_out)    f32 VMEM  conv weights (rows >= C_in*9 are 0)
    bc_ref     : (1, C_out)     f32 VMEM  conv bias
    pool_ref   : (B, B*H*W)     f32 VMEM  block-diagonal 1/(H*W) averaging mat
    fcw_ref    : (C_out, NC)    f32 VMEM  fc weight (already transposed)
    fcb_ref    : (1, NC)        f32 VMEM  fc bias
    out_ref    : (B, 128)       f32       lanes [0:NC]=logits,
                                          lanes [NC:NC+C_out]=pooled, rest 0
    """
    C_out = wc_ref.shape[1]
    NC = fcw_ref.shape[1]
    B = pool_ref.shape[0]
    lanes = out_ref.shape[1]

    # Conv as one MXU GEMM: (B*H*W, KP) x (KP, C_out); zero-padded K columns
    # of `patches` match zero-padded rows of `wc`, so they contribute nothing.
    feat = jnp.dot(patches_ref[...], wc_ref[...],
                   preferred_element_type=jnp.float32)        # (B*H*W, C_out)
    feat = jnp.maximum(feat + bc_ref[...], 0.0)               # bias + ReLU

    # AdaptiveAvgPool2d(1): second MXU GEMM against the averaging matrix.
    pooled = jnp.dot(pool_ref[...], feat,
                     preferred_element_type=jnp.float32)      # (B, C_out)

    # Classifier head: third (tiny) MXU GEMM.
    logits = jnp.dot(pooled, fcw_ref[...],
                     preferred_element_type=jnp.float32) + fcb_ref[...]

    # Single lane-dense writeback: pack both results into one (B, 128) slab.
    pad = jnp.zeros((B, lanes - NC - C_out), jnp.float32)
    out_ref[...] = jnp.concatenate([logits, pooled, pad], axis=1)


def scene_classifier_forward(x, params):
    """Inner model. x: (B, C_in, H, W) NCHW float32. Returns a dict."""
    B, C_in, H, W = x.shape
    C_out = params["conv_w"].shape[0]
    NC = params["fc_w"].shape[0]
    K = C_in * 9
    KP = 128                       # lane-padded contraction dim for the MXU
    LANES = 128                    # lane-dense packed output width
    assert NC + C_out <= LANES

    # Host-side (jit) prep: zero-pad + im2col into a (B*H*W, K) patch matrix
    # (~73 KB at this size), then lane-pad K to 128 so the kernel's GEMM is
    # fully lane-dense.  Column order is ci*9 + kh*3 + kw, matching conv_w.
    xp = jnp.pad(x, ((0, 0), (0, 0), (1, 1), (1, 1)))
    cols = jnp.stack(
        [xp[:, :, i:i + H, j:j + W] for i in range(3) for j in range(3)],
        axis=2,
    )                                                       # (B, C, 9, H, W)
    patches = cols.transpose(0, 3, 4, 1, 2).reshape(B * H * W, K)
    patches = jnp.pad(patches, ((0, 0), (0, KP - K)))       # (B*H*W, KP)

    wc = params["conv_w"].reshape(C_out, K).T               # (K, C_out)
    wc = jnp.pad(wc, ((0, KP - K), (0, 0)))                 # (KP, C_out)
    bc = params["conv_b"].reshape(1, C_out)                 # (1, C_out)
    fcw = params["fc_w"].T                                  # (C_out, NC)
    fcb = params["fc_b"].reshape(1, NC)                     # (1, NC)

    # Block-diagonal averaging matrix for AdaptiveAvgPool2d(1): row b has
    # 1/(H*W) over its own H*W spatial rows of the feature GEMM output.
    pool_mat = jnp.repeat(jnp.eye(B, dtype=jnp.float32), H * W, axis=1)
    pool_mat = pool_mat * (1.0 / float(H * W))              # (B, B*H*W)

    packed = pl.pallas_call(
        _fused_scene_kernel,
        out_shape=jax.ShapeDtypeStruct((B, LANES), jnp.float32),
        in_specs=[
            pl.BlockSpec(memory_space=pltpu.MemorySpace.VMEM),   # patches
            pl.BlockSpec(memory_space=pltpu.MemorySpace.VMEM),   # conv w
            pl.BlockSpec(memory_space=pltpu.MemorySpace.VMEM),   # conv b
            pl.BlockSpec(memory_space=pltpu.MemorySpace.VMEM),   # pool mat
            pl.BlockSpec(memory_space=pltpu.MemorySpace.VMEM),   # fc w
            pl.BlockSpec(memory_space=pltpu.MemorySpace.VMEM),   # fc b
        ],
        out_specs=pl.BlockSpec(memory_space=pltpu.MemorySpace.VMEM),
    )(patches, wc, bc, pool_mat, fcw, fcb)

    logits = packed[:, :NC]
    pooled = packed[:, NC:NC + C_out]
    return {"out": logits, "aux": pooled}


_scene_forward_jit = jax.jit(scene_classifier_forward)


def model_wrapper_forward(x, params):
    """Exact semantics of ModelWrapper.forward."""
    data = _scene_forward_jit(x, params)
    if isinstance(data, dict):
        ModelEndpoints = namedtuple("ModelEndpoints", sorted(data.keys()))
        data = ModelEndpoints(**data)
    elif isinstance(data, list):
        data = tuple(data)
    return data


# ----------------------------------------------------------------------------
# Parameters + pure-JAX reference (for a correctness check)
# ----------------------------------------------------------------------------

def init_params(key, c_in=4, c_out=8, num_classes=10):
    k1, k2, k3, k4 = jax.random.split(key, 4)
    return {
        # PyTorch conv weight layout: (C_out, C_in, kH, kW)
        "conv_w": jax.random.normal(k1, (c_out, c_in, 3, 3), jnp.float32) * 0.1,
        "conv_b": jax.random.normal(k2, (c_out,), jnp.float32) * 0.1,
        # PyTorch linear weight layout: (out_features, in_features)
        "fc_w": jax.random.normal(k3, (num_classes, c_out), jnp.float32) * 0.1,
        "fc_b": jax.random.normal(k4, (num_classes,), jnp.float32) * 0.1,
    }


def reference_forward(x, params):
    B, C, H, W = x.shape
    c_out = params["conv_w"].shape[0]
    xp = jnp.pad(x, ((0, 0), (0, 0), (1, 1), (1, 1)))
    cols = jnp.stack(
        [xp[:, :, i:i + H, j:j + W] for i in range(3) for j in range(3)],
        axis=2,
    )                                                      # (B, C, 9, H, W)
    cols = cols.transpose(0, 3, 4, 1, 2).reshape(B * H * W, C * 9)
    w = params["conv_w"].reshape(c_out, C * 9)
    feat = jnp.maximum(cols @ w.T + params["conv_b"][None, :], 0.0)
    pooled = feat.reshape(B, H * W, c_out).mean(axis=1)    # (B, c_out)
    logits = pooled @ params["fc_w"].T + params["fc_b"][None, :]
    return logits, pooled


# ----------------------------------------------------------------------------
# Main
# ----------------------------------------------------------------------------

if __name__ == "__main__":
    key = jax.random.PRNGKey(0)
    k_params, k_x = jax.random.split(key)

    B, C_IN, H, W = 2, 4, 16, 16
    params = init_params(k_params, c_in=C_IN, c_out=8, num_classes=10)
    x = jax.random.normal(k_x, (B, C_IN, H, W), jnp.float32)

    out = model_wrapper_forward(x, params)
    jax.block_until_ready(out.out)
    jax.block_until_ready(out.aux)

    # structural checks (ModelWrapper semantics)
    assert type(out).__name__ == "ModelEndpoints"
    assert out._fields == ("aux", "out")
    assert out.out.shape == (B, 10) and out.aux.shape == (B, 8)

    # numerical check against a pure-JAX reference
    ref_logits, ref_pooled = reference_forward(x, params)
    assert bool(jnp.allclose(out.out, ref_logits, atol=1e-4, rtol=1e-4))
    assert bool(jnp.allclose(out.aux, ref_pooled, atol=1e-4, rtol=1e-4))

    print("KERNEL_OK")
</pallas_src>

<mosaic_0001>
module attributes {stable_mosaic.version = 11 : i64} {
  func.func @_fused_scene_kernel(%arg0: memref<512x128xf32, #tpu.memory_space<vmem>>, %arg1: memref<128x8xf32, #tpu.memory_space<vmem>>, %arg2: memref<1x8xf32, #tpu.memory_space<vmem>>, %arg3: memref<2x512xf32, #tpu.memory_space<vmem>>, %arg4: memref<8x10xf32, #tpu.memory_space<vmem>>, %arg5: memref<1x10xf32, #tpu.memory_space<vmem>>, %arg6: memref<2x128xf32, #tpu.memory_space<vmem>>) attributes {dimension_semantics = [], scalar_prefetch = 0 : i64, scratch_operands = 0 : i64, tpu.core_type = #tpu.core_type<tc>} {
    %c0 = arith.constant 0 : index
    %c0_0 = arith.constant 0 : index
    %0 = vector.load %arg0[%c0, %c0_0] : memref<512x128xf32, #tpu.memory_space<vmem>>, vector<512x128xf32>
    %c0_1 = arith.constant 0 : index
    %c0_2 = arith.constant 0 : index
    %1 = vector.load %arg1[%c0_1, %c0_2] : memref<128x8xf32, #tpu.memory_space<vmem>>, vector<128x8xf32>
    %cst = arith.constant dense<0.000000e+00> : vector<512x8xf32>
    %2 = tpu.matmul %0, %1, %cst {dimension_numbers = #tpu.dot_dimension_numbers<[1], [0], [0], [1], [0, 0, 1, 1], [], []>} : vector<512x128xf32>, vector<128x8xf32>, vector<512x8xf32> -> vector<512x8xf32>
    %c0_3 = arith.constant 0 : index
    %c0_4 = arith.constant 0 : index
    %3 = vector.load %arg2[%c0_3, %c0_4] : memref<1x8xf32, #tpu.memory_space<vmem>>, vector<1x8xf32>
    %4 = vector.broadcast %3 : vector<1x8xf32> to vector<512x8xf32>
    %5 = arith.addf %2, %4 : vector<512x8xf32>
    %cst_5 = arith.constant 0.000000e+00 : f32
    %6 = vector.broadcast %cst_5 : f32 to vector<512x8xf32>
    %7 = arith.maximumf %5, %6 : vector<512x8xf32>
    %c0_6 = arith.constant 0 : index
    %c0_7 = arith.constant 0 : index
    %8 = vector.load %arg3[%c0_6, %c0_7] : memref<2x512xf32, #tpu.memory_space<vmem>>, vector<2x512xf32>
    %cst_8 = arith.constant dense<0.000000e+00> : vector<2x8xf32>
    %9 = tpu.matmul %8, %7, %cst_8 {dimension_numbers = #tpu.dot_dimension_numbers<[1], [0], [0], [1], [0, 0, 1, 1], [], []>} : vector<2x512xf32>, vector<512x8xf32>, vector<2x8xf32> -> vector<2x8xf32>
    %c0_9 = arith.constant 0 : index
    %c0_10 = arith.constant 0 : index
    %10 = vector.load %arg4[%c0_9, %c0_10] : memref<8x10xf32, #tpu.memory_space<vmem>>, vector<8x10xf32>
    %cst_11 = arith.constant dense<0.000000e+00> : vector<2x10xf32>
    %11 = tpu.matmul %9, %10, %cst_11 {dimension_numbers = #tpu.dot_dimension_numbers<[1], [0], [0], [1], [0, 0, 1, 1], [], []>} : vector<2x8xf32>, vector<8x10xf32>, vector<2x10xf32> -> vector<2x10xf32>
    %c0_12 = arith.constant 0 : index
    %c0_13 = arith.constant 0 : index
    %12 = vector.load %arg5[%c0_12, %c0_13] : memref<1x10xf32, #tpu.memory_space<vmem>>, vector<1x10xf32>
    %13 = vector.broadcast %12 : vector<1x10xf32> to vector<2x10xf32>
    %14 = arith.addf %11, %13 : vector<2x10xf32>
    %cst_14 = arith.constant 0.000000e+00 : f32
    %15 = vector.broadcast %cst_14 : f32 to vector<2x110xf32>
    %16 = tpu.concatenate %14, %9, %15 in 1 : vector<2x10xf32>, vector<2x8xf32>, vector<2x110xf32> -> vector<2x128xf32>
    %c0_15 = arith.constant 0 : index
    %c0_16 = arith.constant 0 : index
    %17 = vector.load %arg6[%c0_15, %c0_16] : memref<2x128xf32, #tpu.memory_space<vmem>>, vector<2x128xf32>
    tpu.vector_store %arg6[%c0_15, %c0_16], %16 {strides = array<i32>} : memref<2x128xf32, #tpu.memory_space<vmem>>, vector<2x128xf32>,
    return
  }
}

</mosaic_0001>

<llo_original>
// kernel: scene_classifier_forward.1
$region0: #{scene_classifier_forward.1}
  #allocation0 [shape = 'u32[]', space=smem, size = 0x4, offset = 0x4, fixed_abs, tag = 'smem constant byte address 0x4 - core index']
  #allocation1 [shape = 'u32[144,128]{1,0:T(1,128)}', space=vmem, size = 0x12000, scoped, tag = 'internal scratch']
  %s0 = inlined_call_operand.vmem [shape: f32[512,128], index: 0, kind: input, shape index: {}]
  %s1 = inlined_call_operand.vmem [shape: f32[128,8], index: 1, kind: input, shape index: {}]
  %s2 = inlined_call_operand.vmem [shape: f32[1,8], index: 2, kind: input, shape index: {}]
  %s3 = inlined_call_operand.vmem [shape: f32[2,512], index: 3, kind: input, shape index: {}]
  %s4 = inlined_call_operand.vmem [shape: f32[8,10], index: 4, kind: input, shape index: {}]
  %s5 = inlined_call_operand.vmem [shape: f32[1,10], index: 5, kind: input, shape index: {}]
  %s6 = inlined_call_operand.vmem [shape: f32[2,128], index: 6, kind: output, shape index: {}]
  %s7 = sld [smem:[#allocation0]]
  $region34: #{scene_classifier_forward.1} parent=0
    _
  %s9 = ssub.s32 1, %s7
  %s10 = scalar_select 0, %s9, %s7
  // Predicated region
  $region2: #{scene_classifier_forward.1} parent=0 // pred_check
    _
  $region3: #{scene_classifier_forward.1} parent=0 // pred_check_branch
    %12 = sbr.rel (0) target = $region5
  $region4: #{scene_classifier_forward.1} parent=0 // pred_region
    _
  $region5: #{scene_classifier_forward.1} parent=0 // pred_fallthru
    _
  // Predicated region
  $region6: #{scene_classifier_forward.1} parent=0 // pred_check
    _
  $region7: #{scene_classifier_forward.1} parent=0 // pred_check_branch
    %14 = sbr.rel (0) target = $region9
  $region8: #{scene_classifier_forward.1} parent=0 // pred_region
    _
  $region9: #{scene_classifier_forward.1} parent=0 // pred_fallthru
    _
  // Predicated region
  $region10: #{scene_classifier_forward.1} parent=0 // pred_check
    _
  $region11: #{scene_classifier_forward.1} parent=0 // pred_check_branch
    %16 = sbr.rel (0) target = $region13
  $region12: #{scene_classifier_forward.1} parent=0 // pred_region
    _
  $region13: #{scene_classifier_forward.1} parent=0 // pred_fallthru
    _
  // Predicated region
  $region14: #{scene_classifier_forward.1} parent=0 // pred_check
    _
  $region15: #{scene_classifier_forward.1} parent=0 // pred_check_branch
    %18 = sbr.rel (0) target = $region17
  $region16: #{scene_classifier_forward.1} parent=0 // pred_region
    _
  $region17: #{scene_classifier_forward.1} parent=0 // pred_fallthru
    _
  // Predicated region
  $region18: #{scene_classifier_forward.1} parent=0 // pred_check
    _
  $region19: #{scene_classifier_forward.1} parent=0 // pred_check_branch
    %20 = sbr.rel (0) target = $region21
  $region20: #{scene_classifier_forward.1} parent=0 // pred_region
    _
  $region21: #{scene_classifier_forward.1} parent=0 // pred_fallthru
    _
  // Predicated region
  $region22: #{scene_classifier_forward.1} parent=0 // pred_check
    _
  $region23: #{scene_classifier_forward.1} parent=0 // pred_check_branch
    %22 = sbr.rel (0) target = $region25
  $region24: #{scene_classifier_forward.1} parent=0 // pred_region
    _
  $region25: #{scene_classifier_forward.1} parent=0 // pred_fallthru
    _
  %v23 = vld [vmem:[%s0] sm:$0xff]
  %v24 = vld [vmem:[%s0 + $0x8] sm:$0xff]
  %v25 = vld [vmem:[%s0 + $0x10] sm:$0xff]
  %v26 = vld [vmem:[%s0 + $0x18] sm:$0xff]
  %v27 = vld [vmem:[%s0 + $0x20] sm:$0xff]
  %v28 = vld [vmem:[%s0 + $0x28] sm:$0xff]
  %v29 = vld [vmem:[%s0 + $0x30] sm:$0xff]
  %v30 = vld [vmem:[%s0 + $0x38] sm:$0xff]
  %v31 = vld [vmem:[%s0 + $0x40] sm:$0xff]
  %v32 = vld [vmem:[%s0 + $0x48] sm:$0xff]
  %v33 = vld [vmem:[%s0 + $0x50] sm:$0xff]
  %v34 = vld [vmem:[%s0 + $0x58] sm:$0xff]
  %v35 = vld [vmem:[%s0 + $0x60] sm:$0xff]
  %v36 = vld [vmem:[%s0 + $0x68] sm:$0xff]
  %v37 = vld [vmem:[%s0 + $0x70] sm:$0xff]
  %v38 = vld [vmem:[%s0 + $0x78] sm:$0xff]
  %v39 = vld [vmem:[%s0 + $0x80] sm:$0xff]
  %v40 = vld [vmem:[%s0 + $0x88] sm:$0xff]
  %v41 = vld [vmem:[%s0 + $0x90] sm:$0xff]
  %v42 = vld [vmem:[%s0 + $0x98] sm:$0xff]
  %v43 = vld [vmem:[%s0 + $0xa0] sm:$0xff]
  %v44 = vld [vmem:[%s0 + $0xa8] sm:$0xff]
  %v45 = vld [vmem:[%s0 + $0xb0] sm:$0xff]
  %v46 = vld [vmem:[%s0 + $0xb8] sm:$0xff]
  %v47 = vld [vmem:[%s0 + $0xc0] sm:$0xff]
  %v48 = vld [vmem:[%s0 + $0xc8] sm:$0xff]
  %v49 = vld [vmem:[%s0 + $0xd0] sm:$0xff]
  %v50 = vld [vmem:[%s0 + $0xd8] sm:$0xff]
  %v51 = vld [vmem:[%s0 + $0xe0] sm:$0xff]
  %v52 = vld [vmem:[%s0 + $0xe8] sm:$0xff]
  %v53 = vld [vmem:[%s0 + $0xf0] sm:$0xff]
  %v54 = vld [vmem:[%s0 + $0xf8] sm:$0xff]
  %v55 = vld [vmem:[%s0 + $0x100] sm:$0xff]
  %v56 = vld [vmem:[%s0 + $0x108] sm:$0xff]
  %v57 = vld [vmem:[%s0 + $0x110] sm:$0xff]
  %v58 = vld [vmem:[%s0 + $0x118] sm:$0xff]
  %v59 = vld [vmem:[%s0 + $0x120] sm:$0xff]
  %v60 = vld [vmem:[%s0 + $0x128] sm:$0xff]
  %v61 = vld [vmem:[%s0 + $0x130] sm:$0xff]
  %v62 = vld [vmem:[%s0 + $0x138] sm:$0xff]
  %v63 = vld [vmem:[%s0 + $0x140] sm:$0xff]
  %v64 = vld [vmem:[%s0 + $0x148] sm:$0xff]
  %v65 = vld [vmem:[%s0 + $0x150] sm:$0xff]
  %v66 = vld [vmem:[%s0 + $0x158] sm:$0xff]
  %v67 = vld [vmem:[%s0 + $0x160] sm:$0xff]
  %v68 = vld [vmem:[%s0 + $0x168] sm:$0xff]
  %v69 = vld [vmem:[%s0 + $0x170] sm:$0xff]
  %v70 = vld [vmem:[%s0 + $0x178] sm:$0xff]
  %v71 = vld [vmem:[%s0 + $0x180] sm:$0xff]
  %v72 = vld [vmem:[%s0 + $0x188] sm:$0xff]
  %v73 = vld [vmem:[%s0 + $0x190] sm:$0xff]
  %v74 = vld [vmem:[%s0 + $0x198] sm:$0xff]
  %v75 = vld [vmem:[%s0 + $0x1a0] sm:$0xff]
  %v76 = vld [vmem:[%s0 + $0x1a8] sm:$0xff]
  %v77 = vld [vmem:[%s0 + $0x1b0] sm:$0xff]
  %v78 = vld [vmem:[%s0 + $0x1b8] sm:$0xff]
  %v79 = vld [vmem:[%s0 + $0x1c0] sm:$0xff]
  %v80 = vld [vmem:[%s0 + $0x1c8] sm:$0xff]
  %v81 = vld [vmem:[%s0 + $0x1d0] sm:$0xff]
  %v82 = vld [vmem:[%s0 + $0x1d8] sm:$0xff]
  %v83 = vld [vmem:[%s0 + $0x1e0] sm:$0xff]
  %v84 = vld [vmem:[%s0 + $0x1e8] sm:$0xff]
  %v85 = vld [vmem:[%s0 + $0x1f0] sm:$0xff]
  %v86 = vld [vmem:[%s0 + $0x1f8] sm:$0xff]
  %v87 = vld [vmem:[%s1] sm:$0xff]
  %v88 = vld [vmem:[%s1 + $0x8] sm:$0xff]
  %v89 = vld [vmem:[%s1 + $0x10] sm:$0xff]
  %v90 = vld [vmem:[%s1 + $0x18] sm:$0xff]
  %v91 = vld [vmem:[%s1 + $0x20] sm:$0xff]
  %v92 = vld [vmem:[%s1 + $0x28] sm:$0xff]
  %v93 = vld [vmem:[%s1 + $0x30] sm:$0xff]
  %v94 = vld [vmem:[%s1 + $0x38] sm:$0xff]
  %v95 = vld [vmem:[%s1 + $0x40] sm:$0xff]
  %v96 = vld [vmem:[%s1 + $0x48] sm:$0xff]
  %v97 = vld [vmem:[%s1 + $0x50] sm:$0xff]
  %v98 = vld [vmem:[%s1 + $0x58] sm:$0xff]
  %v99 = vld [vmem:[%s1 + $0x60] sm:$0xff]
  %v100 = vld [vmem:[%s1 + $0x68] sm:$0xff]
  %v101 = vld [vmem:[%s1 + $0x70] sm:$0xff]
  %v102 = vld [vmem:[%s1 + $0x78] sm:$0xff]
  %v103 = vld [vmem:[%s2] sm:$0x1]
  %v105 = vlaneseq
  %v106 = vshrl.u32 %v105, 7
  %v107 = vsub.s32 0, %v106
  %v108 = vrot.slane %v103, %v107
  %110 = vmatprep.subr.mxu0 0.0
  %111 = vmatpush1.msra.mxu0 %v87
  %112 = vmatprep.subr.mxu0 0.0
  %113 = vmatpush1.msra.mxu0 %v88
  %114 = vmatprep.subr.mxu0 0.0
  %115 = vmatpush1.msra.mxu0 %v89
  %116 = vmatprep.subr.mxu0 0.0
  %117 = vmatpush1.msra.mxu0 %v90
  %118 = vmatprep.subr.mxu0 0.0
  %119 = vmatpush1.msra.mxu0 %v91
  %120 = vmatprep.subr.mxu0 0.0
  %121 = vmatpush1.msra.mxu0 %v92
  %122 = vmatprep.subr.mxu0 0.0
  %123 = vmatpush1.msra.mxu0 %v93
  %124 = vmatprep.subr.mxu0 0.0
  %125 = vmatpush1.msra.mxu0 %v94
  %126 = vmatprep.subr.mxu0 0.0
  %127 = vmatpush1.msra.mxu0 %v95
  %128 = vmatprep.subr.mxu0 0.0
  %129 = vmatpush1.msra.mxu0 %v96
  %130 = vmatprep.subr.mxu0 0.0
  %131 = vmatpush1.msra.mxu0 %v97
  %132 = vmatprep.subr.mxu0 0.0
  %133 = vmatpush1.msra.mxu0 %v98
  %134 = vmatprep.subr.mxu0 0.0
  %135 = vmatpush1.msra.mxu0 %v99
  %136 = vmatprep.subr.mxu0 0.0
  %137 = vmatpush1.msra.mxu0 %v100
  %138 = vmatprep.subr.mxu0 0.0
  %139 = vmatpush1.msra.mxu0 %v101
  %140 = vmatprep.subr.mxu0 0.0
  %141 = vmatpush1.msra.mxu0 %v102
  %142 = vmatprep.subr.mxu0 0.0
  %143 = vmatpush1.msra.mxu0 0.0
  %144 = vmatprep.subr.mxu0 0.0
  %145 = vmatpush1.msra.mxu0 0.0
  %146 = vmatprep.subr.mxu0 0.0
  %147 = vmatpush1.msra.mxu0 0.0
  %148 = vmatprep.subr.mxu0 0.0
  %149 = vmatpush1.msra.mxu0 0.0
  %150 = vmatprep.subr.mxu0 0.0
  %151 = vmatpush1.msra.mxu0 0.0
  %152 = vmatprep.subr.mxu0 0.0
  %153 = vmatpush1.msra.mxu0 0.0
  %154 = vmatprep.subr.mxu0 0.0
  %155 = vmatpush1.msra.mxu0 0.0
  %156 = vmatprep.subr.mxu0 0.0
  %157 = vmatpush1.msra.mxu0 0.0
  %158 = vmatprep.subr.mxu0 0.0
  %159 = vmatpush1.msra.mxu0 0.0
  %160 = vmatprep.subr.mxu0 0.0
  %161 = vmatpush1.msra.mxu0 0.0
  %162 = vmatprep.subr.mxu0 0.0
  %163 = vmatpush1.msra.mxu0 0.0
  %164 = vmatprep.subr.mxu0 0.0
  %165 = vmatpush1.msra.mxu0 0.0
  %166 = vmatprep.subr.mxu0 0.0
  %167 = vmatpush1.msra.mxu0 0.0
  %168 = vmatprep.subr.mxu0 0.0
  %169 = vmatpush1.msra.mxu0 0.0
  %170 = vmatprep.subr.mxu0 0.0
  %171 = vmatpush1.msra.mxu0 0.0
  %172 = vmatprep.subr.mxu0 0.0
  %173 = vmatpush1.msra.mxu0 0.0
  %174 = vmatprep.mubr.f32.mxu0 0.0
  %175 = vmatmul.mubr.f32.gmra.mrb[0].mxu0 %v23
  %v176 = vpop.f32.mrb[0].mxu0
  %v177 = vadd.f32 %v108, %v176
  %v178 = vpop.f32.mrb[0].mxu0
  %179 = vmatprep.mubr.f32.mxu0 0.0
  %180 = vmatmul.mubr.f32.gmra.mrb[0].mxu0 %v24
  %v181 = vpop.f32.mrb[0].mxu0
  %v182 = vadd.f32 %v108, %v181
  %v183 = vpop.f32.mrb[0].mxu0
  %184 = vmatprep.mubr.f32.mxu0 0.0
  %185 = vmatmul.mubr.f32.gmra.mrb[0].mxu0 %v25
  %v186 = vpop.f32.mrb[0].mxu0
  %v187 = vadd.f32 %v108, %v186
  %v188 = vpop.f32.mrb[0].mxu0
  %189 = vmatprep.mubr.f32.mxu0 0.0
  %190 = vmatmul.mubr.f32.gmra.mrb[0].mxu0 %v26
  %v191 = vpop.f32.mrb[0].mxu0
  %v192 = vadd.f32 %v108, %v191
  %v193 = vpop.f32.mrb[0].mxu0
  %194 = vmatprep.mubr.f32.mxu0 0.0
  %195 = vmatmul.mubr.f32.gmra.mrb[0].mxu0 %v27
  %v196 = vpop.f32.mrb[0].mxu0
  %v197 = vadd.f32 %v108, %v196
  %v198 = vpop.f32.mrb[0].mxu0
  %199 = vmatprep.mubr.f32.mxu0 0.0
  %200 = vmatmul.mubr.f32.gmra.mrb[0].mxu0 %v28
  %v201 = vpop.f32.mrb[0].mxu0
  %v202 = vadd.f32 %v108, %v201
  %v203 = vpop.f32.mrb[0].mxu0
  %204 = vmatprep.mubr.f32.mxu0 0.0
  %205 = vmatmul.mubr.f32.gmra.mrb[0].mxu0 %v29
  %v206 = vpop.f32.mrb[0].mxu0
  %v207 = vadd.f32 %v108, %v206
  %v208 = vpop.f32.mrb[0].mxu0
  %209 = vmatprep.mubr.f32.mxu0 0.0
  %210 = vmatmul.mubr.f32.gmra.mrb[0].mxu0 %v30
  %v211 = vpop.f32.mrb[0].mxu0
  %v212 = vadd.f32 %v108, %v211
  %v213 = vpop.f32.mrb[0].mxu0
  %214 = vmatprep.mubr.f32.mxu0 0.0
  %215 = vmatmul.mubr.f32.gmra.mrb[0].mxu0 %v31
  %v216 = vpop.f32.mrb[0].mxu0
  %v217 = vadd.f32 %v108, %v216
  %v218 = vpop.f32.mrb[0].mxu0
  %219 = vmatprep.mubr.f32.mxu0 0.0
  %220 = vmatmul.mubr.f32.gmra.mrb[0].mxu0 %v32
  %v221 = vpop.f32.mrb[0].mxu0
  %v222 = vadd.f32 %v108, %v221
  %v223 = vpop.f32.mrb[0].mxu0
  %224 = vmatprep.mubr.f32.mxu0 0.0
  %225 = vmatmul.mubr.f32.gmra.mrb[0].mxu0 %v33
  %v226 = vpop.f32.mrb[0].mxu0
  %v227 = vadd.f32 %v108, %v226
  %v228 = vpop.f32.mrb[0].mxu0
  %229 = vmatprep.mubr.f32.mxu0 0.0
  %230 = vmatmul.mubr.f32.gmra.mrb[0].mxu0 %v34
  %v231 = vpop.f32.mrb[0].mxu0
  %v232 = vadd.f32 %v108, %v231
  %v233 = vpop.f32.mrb[0].mxu0
  %234 = vmatprep.mubr.f32.mxu0 0.0
  %235 = vmatmul.mubr.f32.gmra.mrb[0].mxu0 %v35
  %v236 = vpop.f32.mrb[0].mxu0
  %v237 = vadd.f32 %v108, %v236
  %v238 = vpop.f32.mrb[0].mxu0
  %239 = vmatprep.mubr.f32.mxu0 0.0
  %240 = vmatmul.mubr.f32.gmra.mrb[0].mxu0 %v36
  %v241 = vpop.f32.mrb[0].mxu0
  %v242 = vadd.f32 %v108, %v241
  %v243 = vpop.f32.mrb[0].mxu0
  %244 = vmatprep.mubr.f32.mxu0 0.0
  %245 = vmatmul.mubr.f32.gmra.mrb[0].mxu0 %v37
  %v246 = vpop.f32.mrb[0].mxu0
  %v247 = vadd.f32 %v108, %v246
  %v248 = vpop.f32.mrb[0].mxu0
  %249 = vmatprep.mubr.f32.mxu0 0.0
  %250 = vmatmul.mubr.f32.gmra.mrb[0].mxu0 %v38
  %v251 = vpop.f32.mrb[0].mxu0
  %v252 = vadd.f32 %v108, %v251
  %v253 = vpop.f32.mrb[0].mxu0
  %254 = vmatprep.mubr.f32.mxu0 0.0
  %255 = vmatmul.mubr.f32.gmra.mrb[0].mxu0 %v39
  %v256 = vpop.f32.mrb[0].mxu0
  %v257 = vadd.f32 %v108, %v256
  %v258 = vpop.f32.mrb[0].mxu0
  %259 = vmatprep.mubr.f32.mxu0 0.0
  %260 = vmatmul.mubr.f32.gmra.mrb[0].mxu0 %v40
  %v261 = vpop.f32.mrb[0].mxu0
  %v262 = vadd.f32 %v108, %v261
  %v263 = vpop.f32.mrb[0].mxu0
  %264 = vmatprep.mubr.f32.mxu0 0.0
  %265 = vmatmul.mubr.f32.gmra.mrb[0].mxu0 %v41
  %v266 = vpop.f32.mrb[0].mxu0
  %v267 = vadd.f32 %v108, %v266
  %v268 = vpop.f32.mrb[0].mxu0
  %269 = vmatprep.mubr.f32.mxu0 0.0
  %270 = vmatmul.mubr.f32.gmra.mrb[0].mxu0 %v42
  %v271 = vpop.f32.mrb[0].mxu0
  %v272 = vadd.f32 %v108, %v271
  %v273 = vpop.f32.mrb[0].mxu0
  %274 = vmatprep.mubr.f32.mxu0 0.0
  %275 = vmatmul.mubr.f32.gmra.mrb[0].mxu0 %v43
  %v276 = vpop.f32.mrb[0].mxu0
  %v277 = vadd.f32 %v108, %v276
  %v278 = vpop.f32.mrb[0].mxu0
  %279 = vmatprep.mubr.f32.mxu0 0.0
  %280 = vmatmul.mubr.f32.gmra.mrb[0].mxu0 %v44
  %v281 = vpop.f32.mrb[0].mxu0
  %v282 = vadd.f32 %v108, %v281
  %v283 = vpop.f32.mrb[0].mxu0
  %284 = vmatprep.mubr.f32.mxu0 0.0
  %285 = vmatmul.mubr.f32.gmra.mrb[0].mxu0 %v45
  %v286 = vpop.f32.mrb[0].mxu0
  %v287 = vadd.f32 %v108, %v286
  %v288 = vpop.f32.mrb[0].mxu0
  %289 = vmatprep.mubr.f32.mxu0 0.0
  %290 = vmatmul.mubr.f32.gmra.mrb[0].mxu0 %v46
  %v291 = vpop.f32.mrb[0].mxu0
  %v292 = vadd.f32 %v108, %v291
  %v293 = vpop.f32.mrb[0].mxu0
  %294 = vmatprep.mubr.f32.mxu0 0.0
  %295 = vmatmul.mubr.f32.gmra.mrb[0].mxu0 %v47
  %v296 = vpop.f32.mrb[0].mxu0
  %v297 = vadd.f32 %v108, %v296
  %v298 = vpop.f32.mrb[0].mxu0
  %299 = vmatprep.mubr.f32.mxu0 0.0
  %300 = vmatmul.mubr.f32.gmra.mrb[0].mxu0 %v48
  %v301 = vpop.f32.mrb[0].mxu0
  %v302 = vadd.f32 %v108, %v301
  %v303 = vpop.f32.mrb[0].mxu0
  %304 = vmatprep.mubr.f32.mxu0 0.0
  %305 = vmatmul.mubr.f32.gmra.mrb[0].mxu0 %v49
  %v306 = vpop.f32.mrb[0].mxu0
  %v307 = vadd.f32 %v108, %v306
  %v308 = vpop.f32.mrb[0].mxu0
  %309 = vmatprep.mubr.f32.mxu0 0.0
  %310 = vmatmul.mubr.f32.gmra.mrb[0].mxu0 %v50
  %v311 = vpop.f32.mrb[0].mxu0
  %v312 = vadd.f32 %v108, %v311
  %v313 = vpop.f32.mrb[0].mxu0
  %314 = vmatprep.mubr.f32.mxu0 0.0
  %315 = vmatmul.mubr.f32.gmra.mrb[0].mxu0 %v51
  %v316 = vpop.f32.mrb[0].mxu0
  %v317 = vadd.f32 %v108, %v316
  %v318 = vpop.f32.mrb[0].mxu0
  %319 = vmatprep.mubr.f32.mxu0 0.0
  %320 = vmatmul.mubr.f32.gmra.mrb[0].mxu0 %v52
  %v321 = vpop.f32.mrb[0].mxu0
  %v322 = vadd.f32 %v108, %v321
  %v323 = vpop.f32.mrb[0].mxu0
  %324 = vmatprep.mubr.f32.mxu0 0.0
  %325 = vmatmul.mubr.f32.gmra.mrb[0].mxu0 %v53
  %v326 = vpop.f32.mrb[0].mxu0
  %v327 = vadd.f32 %v108, %v326
  %v328 = vpop.f32.mrb[0].mxu0
  %329 = vmatprep.mubr.f32.mxu0 0.0
  %330 = vmatmul.mubr.f32.gmra.mrb[0].mxu0 %v54
  %v331 = vpop.f32.mrb[0].mxu0
  %v332 = vadd.f32 %v108, %v331
  %v333 = vpop.f32.mrb[0].mxu0
  %334 = vmatprep.mubr.f32.mxu0 0.0
  %335 = vmatmul.mubr.f32.gmra.mrb[0].mxu0 %v55
  %v336 = vpop.f32.mrb[0].mxu0
  %v337 = vadd.f32 %v108, %v336
  %v338 = vpop.f32.mrb[0].mxu0
  %339 = vmatprep.mubr.f32.mxu0 0.0
  %340 = vmatmul.mubr.f32.gmra.mrb[0].mxu0 %v56
  %v341 = vpop.f32.mrb[0].mxu0
  %v342 = vadd.f32 %v108, %v341
  %v343 = vpop.f32.mrb[0].mxu0
  %344 = vmatprep.mubr.f32.mxu0 0.0
  %345 = vmatmul.mubr.f32.gmra.mrb[0].mxu0 %v57
  %v346 = vpop.f32.mrb[0].mxu0
  %v347 = vadd.f32 %v108, %v346
  %v348 = vpop.f32.mrb[0].mxu0
  %349 = vmatprep.mubr.f32.mxu0 0.0
  %350 = vmatmul.mubr.f32.gmra.mrb[0].mxu0 %v58
  %v351 = vpop.f32.mrb[0].mxu0
  %v352 = vadd.f32 %v108, %v351
  %v353 = vpop.f32.mrb[0].mxu0
  %354 = vmatprep.mubr.f32.mxu0 0.0
  %355 = vmatmul.mubr.f32.gmra.mrb[0].mxu0 %v59
  %v356 = vpop.f32.mrb[0].mxu0
  %v357 = vadd.f32 %v108, %v356
  %v358 = vpop.f32.mrb[0].mxu0
  %359 = vmatprep.mubr.f32.mxu0 0.0
  %360 = vmatmul.mubr.f32.gmra.mrb[0].mxu0 %v60
  %v361 = vpop.f32.mrb[0].mxu0
  %v362 = vadd.f32 %v108, %v361
  %v363 = vpop.f32.mrb[0].mxu0
  %364 = vmatprep.mubr.f32.mxu0 0.0
  %365 = vmatmul.mubr.f32.gmra.mrb[0].mxu0 %v61
  %v366 = vpop.f32.mrb[0].mxu0
  %v367 = vadd.f32 %v108, %v366
  %v368 = vpop.f32.mrb[0].mxu0
  %369 = vmatprep.mubr.f32.mxu0 0.0
  %370 = vmatmul.mubr.f32.gmra.mrb[0].mxu0 %v62
  %v371 = vpop.f32.mrb[0].mxu0
  %v372 = vadd.f32 %v108, %v371
  %v373 = vpop.f32.mrb[0].mxu0
  %374 = vmatprep.mubr.f32.mxu0 0.0
  %375 = vmatmul.mubr.f32.gmra.mrb[0].mxu0 %v63
  %v376 = vpop.f32.mrb[0].mxu0
  %v377 = vadd.f32 %v108, %v376
  %v378 = vpop.f32.mrb[0].mxu0
  %379 = vmatprep.mubr.f32.mxu0 0.0
  %380 = vmatmul.mubr.f32.gmra.mrb[0].mxu0 %v64
  %v381 = vpop.f32.mrb[0].mxu0
  %v382 = vadd.f32 %v108, %v381
  %v383 = vpop.f32.mrb[0].mxu0
  %384 = vmatprep.mubr.f32.mxu0 0.0
  %385 = vmatmul.mubr.f32.gmra.mrb[0].mxu0 %v65
  %v386 = vpop.f32.mrb[0].mxu0
  %v387 = vadd.f32 %v108, %v386
  %v388 = vpop.f32.mrb[0].mxu0
  %389 = vmatprep.mubr.f32.mxu0 0.0
  %390 = vmatmul.mubr.f32.gmra.mrb[0].mxu0 %v66
  %v391 = vpop.f32.mrb[0].mxu0
  %v392 = vadd.f32 %v108, %v391
  %v393 = vpop.f32.mrb[0].mxu0
  %394 = vmatprep.mubr.f32.mxu0 0.0
  %395 = vmatmul.mubr.f32.gmra.mrb[0].mxu0 %v67
  %v396 = vpop.f32.mrb[0].mxu0
  %v397 = vadd.f32 %v108, %v396
  %v398 = vpop.f32.mrb[0].mxu0
  %399 = vmatprep.mubr.f32.mxu0 0.0
  %400 = vmatmul.mubr.f32.gmra.mrb[0].mxu0 %v68
  %v401 = vpop.f32.mrb[0].mxu0
  %v402 = vadd.f32 %v108, %v401
  %v403 = vpop.f32.mrb[0].mxu0
  %404 = vmatprep.mubr.f32.mxu0 0.0
  %405 = vmatmul.mubr.f32.gmra.mrb[0].mxu0 %v69
  %v406 = vpop.f32.mrb[0].mxu0
  %v407 = vadd.f32 %v108, %v406
  %v408 = vpop.f32.mrb[0].mxu0
  %409 = vmatprep.mubr.f32.mxu0 0.0
  %410 = vmatmul.mubr.f32.gmra.mrb[0].mxu0 %v70
  %v411 = vpop.f32.mrb[0].mxu0
  %v412 = vadd.f32 %v108, %v411
  %v413 = vpop.f32.mrb[0].mxu0
  %414 = vmatprep.mubr.f32.mxu0 0.0
  %415 = vmatmul.mubr.f32.gmra.mrb[0].mxu0 %v71
  %v416 = vpop.f32.mrb[0].mxu0
  %v417 = vadd.f32 %v108, %v416
  %v418 = vpop.f32.mrb[0].mxu0
  %419 = vmatprep.mubr.f32.mxu0 0.0
  %420 = vmatmul.mubr.f32.gmra.mrb[0].mxu0 %v72
  %v421 = vpop.f32.mrb[0].mxu0
  %v422 = vadd.f32 %v108, %v421
  %v423 = vpop.f32.mrb[0].mxu0
  %424 = vmatprep.mubr.f32.mxu0 0.0
  %425 = vmatmul.mubr.f32.gmra.mrb[0].mxu0 %v73
  %v426 = vpop.f32.mrb[0].mxu0
  %v427 = vadd.f32 %v108, %v426
  %v428 = vpop.f32.mrb[0].mxu0
  %429 = vmatprep.mubr.f32.mxu0 0.0
  %430 = vmatmul.mubr.f32.gmra.mrb[0].mxu0 %v74
  %v431 = vpop.f32.mrb[0].mxu0
  %v432 = vadd.f32 %v108, %v431
  %v433 = vpop.f32.mrb[0].mxu0
  %434 = vmatprep.mubr.f32.mxu0 0.0
  %435 = vmatmul.mubr.f32.gmra.mrb[0].mxu0 %v75
  %v436 = vpop.f32.mrb[0].mxu0
  %v437 = vadd.f32 %v108, %v436
  %v438 = vpop.f32.mrb[0].mxu0
  %439 = vmatprep.mubr.f32.mxu0 0.0
  %440 = vmatmul.mubr.f32.gmra.mrb[0].mxu0 %v76
  %v441 = vpop.f32.mrb[0].mxu0
  %v442 = vadd.f32 %v108, %v441
  %v443 = vpop.f32.mrb[0].mxu0
  %444 = vmatprep.mubr.f32.mxu0 0.0
  %445 = vmatmul.mubr.f32.gmra.mrb[0].mxu0 %v77
  %v446 = vpop.f32.mrb[0].mxu0
  %v447 = vadd.f32 %v108, %v446
  %v448 = vpop.f32.mrb[0].mxu0
  %449 = vmatprep.mubr.f32.mxu0 0.0
  %450 = vmatmul.mubr.f32.gmra.mrb[0].mxu0 %v78
  %v451 = vpop.f32.mrb[0].mxu0
  %v452 = vadd.f32 %v108, %v451
  %v453 = vpop.f32.mrb[0].mxu0
  %454 = vmatprep.mubr.f32.mxu0 0.0
  %455 = vmatmul.mubr.f32.gmra.mrb[0].mxu0 %v79
  %v456 = vpop.f32.mrb[0].mxu0
  %v457 = vadd.f32 %v108, %v456
  %v458 = vpop.f32.mrb[0].mxu0
  %459 = vmatprep.mubr.f32.mxu0 0.0
  %460 = vmatmul.mubr.f32.gmra.mrb[0].mxu0 %v80
  %v461 = vpop.f32.mrb[0].mxu0
  %v462 = vadd.f32 %v108, %v461
  %v463 = vpop.f32.mrb[0].mxu0
  %464 = vmatprep.mubr.f32.mxu0 0.0
  %465 = vmatmul.mubr.f32.gmra.mrb[0].mxu0 %v81
  %v466 = vpop.f32.mrb[0].mxu0
  %v467 = vadd.f32 %v108, %v466
  %v468 = vpop.f32.mrb[0].mxu0
  %469 = vmatprep.mubr.f32.mxu0 0.0
  %470 = vmatmul.mubr.f32.gmra.mrb[0].mxu0 %v82
  %v471 = vpop.f32.mrb[0].mxu0
  %v472 = vadd.f32 %v108, %v471
  %v473 = vpop.f32.mrb[0].mxu0
  %474 = vmatprep.mubr.f32.mxu0 0.0
  %475 = vmatmul.mubr.f32.gmra.mrb[0].mxu0 %v83
  %v476 = vpop.f32.mrb[0].mxu0
  %v477 = vadd.f32 %v108, %v476
  %v478 = vpop.f32.mrb[0].mxu0
  %479 = vmatprep.mubr.f32.mxu0 0.0
  %480 = vmatmul.mubr.f32.gmra.mrb[0].mxu0 %v84
  %v481 = vpop.f32.mrb[0].mxu0
  %v482 = vadd.f32 %v108, %v481
  %v483 = vpop.f32.mrb[0].mxu0
  %484 = vmatprep.mubr.f32.mxu0 0.0
  %485 = vmatmul.mubr.f32.gmra.mrb[0].mxu0 %v85
  %v486 = vpop.f32.mrb[0].mxu0
  %v487 = vadd.f32 %v108, %v486
  %v488 = vpop.f32.mrb[0].mxu0
  %489 = vmatprep.mubr.f32.mxu0 0.0
  %490 = vmatmul.mubr.f32.gmra.mrb[0].mxu0 %v86
  %v491 = vpop.f32.mrb[0].mxu0
  %v492 = vadd.f32 %v108, %v491
  %v493 = vpop.f32.mrb[0].mxu0
  %494 = vdwg.mxu0
  %v495 = vmax.f32 %v177, 0.0
  %v496 = vmax.f32 %v182, 0.0
  %v497 = vmax.f32 %v187, 0.0
  %v498 = vmax.f32 %v192, 0.0
  %v499 = vmax.f32 %v197, 0.0
  %v500 = vmax.f32 %v202, 0.0
  %v501 = vmax.f32 %v207, 0.0
  %v502 = vmax.f32 %v212, 0.0
  %v503 = vmax.f32 %v217, 0.0
  %v504 = vmax.f32 %v222, 0.0
  %v505 = vmax.f32 %v227, 0.0
  %v506 = vmax.f32 %v232, 0.0
  %v507 = vmax.f32 %v237, 0.0
  %v508 = vmax.f32 %v242, 0.0
  %v509 = vmax.f32 %v247, 0.0
  %v510 = vmax.f32 %v252, 0.0
  %v511 = vmax.f32 %v257, 0.0
  %v512 = vmax.f32 %v262, 0.0
  %v513 = vmax.f32 %v267, 0.0
  %v514 = vmax.f32 %v272, 0.0
  %v515 = vmax.f32 %v277, 0.0
  %v516 = vmax.f32 %v282, 0.0
  %v517 = vmax.f32 %v287, 0.0
  %v518 = vmax.f32 %v292, 0.0
  %v519 = vmax.f32 %v297, 0.0
  %v520 = vmax.f32 %v302, 0.0
  %v521 = vmax.f32 %v307, 0.0
  %v522 = vmax.f32 %v312, 0.0
  %v523 = vmax.f32 %v317, 0.0
  %v524 = vmax.f32 %v322, 0.0
  %v525 = vmax.f32 %v327, 0.0
  %v526 = vmax.f32 %v332, 0.0
  %v527 = vmax.f32 %v337, 0.0
  %v528 = vmax.f32 %v342, 0.0
  %v529 = vmax.f32 %v347, 0.0
  %v530 = vmax.f32 %v352, 0.0
  %v531 = vmax.f32 %v357, 0.0
  %v532 = vmax.f32 %v362, 0.0
  %v533 = vmax.f32 %v367, 0.0
  %v534 = vmax.f32 %v372, 0.0
  %v535 = vmax.f32 %v377, 0.0
  %v536 = vmax.f32 %v382, 0.0
  %v537 = vmax.f32 %v387, 0.0
  %v538 = vmax.f32 %v392, 0.0
  %v539 = vmax.f32 %v397, 0.0
  %v540 = vmax.f32 %v402, 0.0
  %v541 = vmax.f32 %v407, 0.0
  %v542 = vmax.f32 %v412, 0.0
  %v543 = vmax.f32 %v417, 0.0
  %v544 = vmax.f32 %v422, 0.0
  %v545 = vmax.f32 %v427, 0.0
  %v546 = vmax.f32 %v432, 0.0
  %v547 = vmax.f32 %v437, 0.0
  %v548 = vmax.f32 %v442, 0.0
  %v549 = vmax.f32 %v447, 0.0
  %v550 = vmax.f32 %v452, 0.0
  %v551 = vmax.f32 %v457, 0.0
  %v552 = vmax.f32 %v462, 0.0
  %v553 = vmax.f32 %v467, 0.0
  %v554 = vmax.f32 %v472, 0.0
  %v555 = vmax.f32 %v477, 0.0
  %v556 = vmax.f32 %v482, 0.0
  %v557 = vmax.f32 %v487, 0.0
  %v558 = vmax.f32 %v492, 0.0
  %v559 = vld [vmem:[%s3] sm:$0xff]
  %v561 = vcombine.high %v559, %v559
  %v563 = vunpack.c.l.s4 1983009808
  %v564 = vunpack.c.0.s8 %v563
  %v565 = vlaneseq
  %v566 = vshrl.u32 %v565, 7
  %v567 = vsub.s32 %v564, %v566
  %v568 = vrot.slane %v559, %v567
  %v570 = vunpack.c.l.s4 1983009808
  %v571 = vunpack.c.0.s8 %v570
  %v572 = vlaneseq
  %v573 = vshrl.u32 %v572, 7
  %v574 = vsub.s32 %v571, %v573
  %v575 = vrot.slane %v561, %v574
  %v576 = vcombine.high %v568, %v568
  %v577 = vcombine.high %v575, %v575
  %582 = vmatprep.subr.mxu0 0.0
  %583 = vmatpush1.msra.mxu0 %v495
  %584 = vmatprep.subr.mxu0 0.0
  %585 = vmatpush1.msra.mxu0 %v496
  %586 = vmatprep.subr.mxu0 0.0
  %587 = vmatpush1.msra.mxu0 %v497
  %588 = vmatprep.subr.mxu0 0.0
  %589 = vmatpush1.msra.mxu0 %v498
  %590 = vmatprep.subr.mxu0 0.0
  %591 = vmatpush1.msra.mxu0 %v499
  %592 = vmatprep.subr.mxu0 0.0
  %593 = vmatpush1.msra.mxu0 %v500
  %594 = vmatprep.subr.mxu0 0.0
  %595 = vmatpush1.msra.mxu0 %v501
  %596 = vmatprep.subr.mxu0 0.0
  %597 = vmatpush1.msra.mxu0 %v502
  %598 = vmatprep.subr.mxu0 0.0
  %599 = vmatpush1.msra.mxu0 %v503
  %600 = vmatprep.subr.mxu0 0.0
  %601 = vmatpush1.msra.mxu0 %v504
  %602 = vmatprep.subr.mxu0 0.0
  %603 = vmatpush1.msra.mxu0 %v505
  %604 = vmatprep.subr.mxu0 0.0
  %605 = vmatpush1.msra.mxu0 %v506
  %606 = vmatprep.subr.mxu0 0.0
  %607 = vmatpush1.msra.mxu0 %v507
  %608 = vmatprep.subr.mxu0 0.0
  %609 = vmatpush1.msra.mxu0 %v508
  %610 = vmatprep.subr.mxu0 0.0
  %611 = vmatpush1.msra.mxu0 %v509
  %612 = vmatprep.subr.mxu0 0.0
  %613 = vmatpush1.msra.mxu0 %v510
  %614 = vmatprep.subr.mxu0 0.0
  %615 = vmatpush1.msra.mxu0 %v511
  %616 = vmatprep.subr.mxu0 0.0
  %617 = vmatpush1.msra.mxu0 %v512
  %618 = vmatprep.subr.mxu0 0.0
  %619 = vmatpush1.msra.mxu0 %v513
  %620 = vmatprep.subr.mxu0 0.0
  %621 = vmatpush1.msra.mxu0 %v514
  %622 = vmatprep.subr.mxu0 0.0
  %623 = vmatpush1.msra.mxu0 %v515
  %624 = vmatprep.subr.mxu0 0.0
  %625 = vmatpush1.msra.mxu0 %v516
  %626 = vmatprep.subr.mxu0 0.0
  %627 = vmatpush1.msra.mxu0 %v517
  %628 = vmatprep.subr.mxu0 0.0
  %629 = vmatpush1.msra.mxu0 %v518
  %630 = vmatprep.subr.mxu0 0.0
  %631 = vmatpush1.msra.mxu0 %v519
  %632 = vmatprep.subr.mxu0 0.0
  %633 = vmatpush1.msra.mxu0 %v520
  %634 = vmatprep.subr.mxu0 0.0
  %635 = vmatpush1.msra.mxu0 %v521
  %636 = vmatprep.subr.mxu0 0.0
  %637 = vmatpush1.msra.mxu0 %v522
  %638 = vmatprep.subr.mxu0 0.0
  %639 = vmatpush1.msra.mxu0 %v523
  %640 = vmatprep.subr.mxu0 0.0
  %641 = vmatpush1.msra.mxu0 %v524
  %642 = vmatprep.subr.mxu0 0.0
  %643 = vmatpush1.msra.mxu0 %v525
  %644 = vmatprep.subr.mxu0 0.0
  %645 = vmatpush1.msra.mxu0 %v526
  %646 = vmatprep.mubr.f32.mxu0 %v576
  %647 = vmatmul.mubr.f32.gmra.mrb[0].mxu0 %v568
  %v648 = vpop.f32.mrb[0].mxu0
  %v649 = vadd.f32 0.0, %v648
  %v650 = vpop.f32.mrb[0].mxu0
  %651 = vdwg.mxu0
  %652 = vmatprep.subr.mxu0 0.0
  %653 = vmatpush1.msra.mxu0 %v527
  %654 = vmatprep.subr.mxu0 0.0
  %655 = vmatpush1.msra.mxu0 %v528
  %656 = vmatprep.subr.mxu0 0.0
  %657 = vmatpush1.msra.mxu0 %v529
  %658 = vmatprep.subr.mxu0 0.0
  %659 = vmatpush1.msra.mxu0 %v530
  %660 = vmatprep.subr.mxu0 0.0
  %661 = vmatpush1.msra.mxu0 %v531
  %662 = vmatprep.subr.mxu0 0.0
  %663 = vmatpush1.msra.mxu0 %v532
  %664 = vmatprep.subr.mxu0 0.0
  %665 = vmatpush1.msra.mxu0 %v533
  %666 = vmatprep.subr.mxu0 0.0
  %667 = vmatpush1.msra.mxu0 %v534
  %668 = vmatprep.subr.mxu0 0.0
  %669 = vmatpush1.msra.mxu0 %v535
  %670 = vmatprep.subr.mxu0 0.0
  %671 = vmatpush1.msra.mxu0 %v536
  %672 = vmatprep.subr.mxu0 0.0
  %673 = vmatpush1.msra.mxu0 %v537
  %674 = vmatprep.subr.mxu0 0.0
  %675 = vmatpush1.msra.mxu0 %v538
  %676 = vmatprep.subr.mxu0 0.0
  %677 = vmatpush1.msra.mxu0 %v539
  %678 = vmatprep.subr.mxu0 0.0
  %679 = vmatpush1.msra.mxu0 %v540
  %680 = vmatprep.subr.mxu0 0.0
  %681 = vmatpush1.msra.mxu0 %v541
  %682 = vmatprep.subr.mxu0 0.0
  %683 = vmatpush1.msra.mxu0 %v542
  %684 = vmatprep.subr.mxu0 0.0
  %685 = vmatpush1.msra.mxu0 %v543
  %686 = vmatprep.subr.mxu0 0.0
  %687 = vmatpush1.msra.mxu0 %v544
  %688 = vmatprep.subr.mxu0 0.0
  %689 = vmatpush1.msra.mxu0 %v545
  %690 = vmatprep.subr.mxu0 0.0
  %691 = vmatpush1.msra.mxu0 %v546
  %692 = vmatprep.subr.mxu0 0.0
  %693 = vmatpush1.msra.mxu0 %v547
  %694 = vmatprep.subr.mxu0 0.0
  %695 = vmatpush1.msra.mxu0 %v548
  %696 = vmatprep.subr.mxu0 0.0
  %697 = vmatpush1.msra.mxu0 %v549
  %698 = vmatprep.subr.mxu0 0.0
  %699 = vmatpush1.msra.mxu0 %v550
  %700 = vmatprep.subr.mxu0 0.0
  %701 = vmatpush1.msra.mxu0 %v551
  %702 = vmatprep.subr.mxu0 0.0
  %703 = vmatpush1.msra.mxu0 %v552
  %704 = vmatprep.subr.mxu0 0.0
  %705 = vmatpush1.msra.mxu0 %v553
  %706 = vmatprep.subr.mxu0 0.0
  %707 = vmatpush1.msra.mxu0 %v554
  %708 = vmatprep.subr.mxu0 0.0
  %709 = vmatpush1.msra.mxu0 %v555
  %710 = vmatprep.subr.mxu0 0.0
  %711 = vmatpush1.msra.mxu0 %v556
  %712 = vmatprep.subr.mxu0 0.0
  %713 = vmatpush1.msra.mxu0 %v557
  %714 = vmatprep.subr.mxu0 0.0
  %715 = vmatpush1.msra.mxu0 %v558
  %716 = vmatprep.mubr.f32.mxu0 %v577
  %717 = vmatmul.mubr.f32.gmra.mrb[0].mxu0 %v575
  %v718 = vpop.f32.mrb[0].mxu0
  %v719 = vadd.f32 %v649, %v718
  %v720 = vpop.f32.mrb[0].mxu0
  %721 = vdwg.mxu0
  %v722 = vld [vmem:[%s4] sm:$0xff]
  %v723 = vld [vmem:[%s5] sm:$0x1]
  %v725 = vlaneseq
  %v726 = vshrl.u32 %v725, 7
  %v727 = vsub.s32 0, %v726
  %v728 = vrot.slane %v723, %v727
  %vm730 = vcmask 64512
  %v732 = vsel %vm730, %v719, 0
  %734 = vmatprep.subr.mxu0 0.0
  %735 = vmatpush1.msra.mxu0 %v722
  %736 = vmatprep.subr.mxu0 0.0
  %737 = vmatpush1.msra.mxu0 0.0
  %738 = vmatprep.subr.mxu0 0.0
  %739 = vmatpush1.msra.mxu0 0.0
  %740 = vmatprep.subr.mxu0 0.0
  %741 = vmatpush1.msra.mxu0 0.0
  %742 = vmatprep.subr.mxu0 0.0
  %743 = vmatpush1.msra.mxu0 0.0
  %744 = vmatprep.subr.mxu0 0.0
  %745 = vmatpush1.msra.mxu0 0.0
  %746 = vmatprep.subr.mxu0 0.0
  %747 = vmatpush1.msra.mxu0 0.0
  %748 = vmatprep.subr.mxu0 0.0
  %749 = vmatpush1.msra.mxu0 0.0
  %750 = vmatprep.subr.mxu0 0.0
  %751 = vmatpush1.msra.mxu0 0.0
  %752 = vmatprep.subr.mxu0 0.0
  %753 = vmatpush1.msra.mxu0 0.0
  %754 = vmatprep.subr.mxu0 0.0
  %755 = vmatpush1.msra.mxu0 0.0
  %756 = vmatprep.subr.mxu0 0.0
  %757 = vmatpush1.msra.mxu0 0.0
  %758 = vmatprep.subr.mxu0 0.0
  %759 = vmatpush1.msra.mxu0 0.0
  %760 = vmatprep.subr.mxu0 0.0
  %761 = vmatpush1.msra.mxu0 0.0
  %762 = vmatprep.subr.mxu0 0.0
  %763 = vmatpush1.msra.mxu0 0.0
  %764 = vmatprep.subr.mxu0 0.0
  %765 = vmatpush1.msra.mxu0 0.0
  %766 = vmatprep.subr.mxu0 0.0
  %767 = vmatpush1.msra.mxu0 0.0
  %768 = vmatprep.subr.mxu0 0.0
  %769 = vmatpush1.msra.mxu0 0.0
  %770 = vmatprep.subr.mxu0 0.0
  %771 = vmatpush1.msra.mxu0 0.0
  %772 = vmatprep.subr.mxu0 0.0
  %773 = vmatpush1.msra.mxu0 0.0
  %774 = vmatprep.subr.mxu0 0.0
  %775 = vmatpush1.msra.mxu0 0.0
  %776 = vmatprep.subr.mxu0 0.0
  %777 = vmatpush1.msra.mxu0 0.0
  %778 = vmatprep.subr.mxu0 0.0
  %779 = vmatpush1.msra.mxu0 0.0
  %780 = vmatprep.subr.mxu0 0.0
  %781 = vmatpush1.msra.mxu0 0.0
  %782 = vmatprep.subr.mxu0 0.0
  %783 = vmatpush1.msra.mxu0 0.0
  %784 = vmatprep.subr.mxu0 0.0
  %785 = vmatpush1.msra.mxu0 0.0
  %786 = vmatprep.subr.mxu0 0.0
  %787 = vmatpush1.msra.mxu0 0.0
  %788 = vmatprep.subr.mxu0 0.0
  %789 = vmatpush1.msra.mxu0 0.0
  %790 = vmatprep.subr.mxu0 0.0
  %791 = vmatpush1.msra.mxu0 0.0
  %792 = vmatprep.subr.mxu0 0.0
  %793 = vmatpush1.msra.mxu0 0.0
  %794 = vmatprep.subr.mxu0 0.0
  %795 = vmatpush1.msra.mxu0 0.0
  %796 = vmatprep.subr.mxu0 0.0
  %797 = vmatpush1.msra.mxu0 0.0
  %798 = vmatprep.mubr.f32.mxu0 0.0
  %799 = vmatmul.mubr.f32.gmra.mrb[0].mxu0 %v732
  %v800 = vpop.f32.mrb[0].mxu0
  %v801 = vadd.f32 %v728, %v800
  %v802 = vpop.f32.mrb[0].mxu0
  %803 = vdwg.mxu0
  %804 = vrot.lane.b32.xlu0 %v719, 10
  %v805 = vpop.permute.xlu0 %804
  %vm807 = vcmask 80896
  %v808 = vsel %vm807, %v801, %v805
  %vm809 = vcmask 146432
  %v810 = vsel %vm809, %v808, 0.0
  %811 = vst [vmem:[%s6] sm:$0x3] %v810
  // Predicated region
  $region26: #{scene_classifier_forward.1} parent=0 // pred_check
    _
  $region27: #{scene_classifier_forward.1} parent=0 // pred_check_branch
    %813 = sbr.rel (0) target = $region29
  $region28: #{scene_classifier_forward.1} parent=0 // pred_region
    _
  $region29: #{scene_classifier_forward.1} parent=0 // pred_fallthru
    _
  // Predicated region
  $region30: #{scene_classifier_forward.1} parent=0 // pred_check
    _
  $region31: #{scene_classifier_forward.1} parent=0 // pred_check_branch
    %815 = sbr.rel (0) target = $region33
  $region32: #{scene_classifier_forward.1} parent=0 // pred_region
    _
  $region33: #{scene_classifier_forward.1} parent=0 // pred_fallthru
    _

</llo_original>
